<compile_context>
chip_gen: v5e
topology: v5e:2x2
jax: 0.10.0
libtpu: 0.0.40
codegen_flags: <defaults>
</compile_context>

<pallas_src>
import jax
import jax.numpy as jnp
from jax.experimental import pallas as pl
from jax.experimental.pallas import tpu as pltpu


def _lightbag_kernel(p_ref, i_ref, d_ref, wp_ref, wi_ref, b_ref, o_ref):
    # p/i/d: (Cin, TL)   wp/wi: (Cout, Cin) with BN scale folded in
    # b: (Cout, 1) combined bias   o: (Cout, TL)
    p = p_ref[...]
    i = i_ref[...]
    d = d_ref[...]

    att = jax.nn.sigmoid(d)                 # EUP
    xp = (1.0 - att) * i + p                # (1 - att) * I + P
    xi = att * p + i                        # att * P + I

    # 1x1 convs as MXU matmuls with channels as the contraction dim.
    y = jnp.dot(wp_ref[...], xp, preferred_element_type=jnp.float32,
                precision=jax.lax.Precision.HIGHEST)
    y = y + jnp.dot(wi_ref[...], xi, preferred_element_type=jnp.float32,
                    precision=jax.lax.Precision.HIGHEST)
    o_ref[...] = (y + b_ref[...]).astype(o_ref.dtype)


def lightbag_forward(P, I, D, params, *, eps=1e-5, tile_l=1024):
    """P, I, D: (N, Cin, H, W) float32.  Returns (N, Cout, H, W)."""
    N, Cin, H, W = P.shape
    Cout = params["wp"].shape[0]
    HW = H * W

    # Fold BatchNorm (inference) into per-output-channel scale / bias, then
    # fold the scale straight into the 1x1 conv weights; one combined bias.
    sp = params["gamma_p"] / jnp.sqrt(params["var_p"] + eps)
    bp = params["beta_p"] - params["mean_p"] * sp
    si = params["gamma_i"] / jnp.sqrt(params["var_i"] + eps)
    bi = params["beta_i"] - params["mean_i"] * si

    wp2 = (params["wp"].reshape(Cout, Cin) * sp[:, None]).astype(jnp.float32)
    wi2 = (params["wi"].reshape(Cout, Cin) * si[:, None]).astype(jnp.float32)
    bias = (bp + bi).reshape(Cout, 1).astype(jnp.float32)

    # NCHW -> (N, C, H*W): free reshape (channels on sublanes, spatial on lanes).
    P3 = P.reshape(N, Cin, HW)
    I3 = I.reshape(N, Cin, HW)
    D3 = D.reshape(N, Cin, HW)

    # Lane tile: multiple of 128, large (default up to 1024), capped so the
    # double-buffered f32 streams (3 in + 1 out) stay well under the v7x
    # 64 MiB / scoped-VMEM budget.
    per_lane_bytes = (3 * Cin + Cout) * 4 * 2
    max_tl = max(128, ((24 << 20) // per_lane_bytes) // 128 * 128)
    tl = min(tile_l, pl.cdiv(HW, 128) * 128, max_tl)
    tl = max(128, (tl // 128) * 128)

    HWp = pl.cdiv(HW, tl) * tl
    if HWp != HW:
        pad = ((0, 0), (0, 0), (0, HWp - HW))
        P3 = jnp.pad(P3, pad)
        I3 = jnp.pad(I3, pad)
        D3 = jnp.pad(D3, pad)

    in_spec = pl.BlockSpec((None, Cin, tl), lambda n, l: (n, 0, l))
    w_spec = pl.BlockSpec((Cout, Cin), lambda n, l: (0, 0))
    b_spec = pl.BlockSpec((Cout, 1), lambda n, l: (0, 0))
    out_spec = pl.BlockSpec((None, Cout, tl), lambda n, l: (n, 0, l))

    out3 = pl.pallas_call(
        _lightbag_kernel,
        out_shape=jax.ShapeDtypeStruct((N, Cout, HWp), jnp.float32),
        grid_spec=pltpu.PrefetchScalarGridSpec(
            num_scalar_prefetch=0,
            grid=(N, HWp // tl),
            in_specs=[in_spec, in_spec, in_spec, w_spec, w_spec, b_spec],
            out_specs=out_spec,
        ),
        compiler_params=pltpu.CompilerParams(
            dimension_semantics=("parallel", "parallel"),
            vmem_limit_bytes=48 << 20,
        ),
    )(P3, I3, D3, wp2, wi2, bias)

    if HWp != HW:
        out3 = out3[:, :, :HW]
    return out3.reshape(N, Cout, H, W)


def lightbag_reference(P, I, D, params, *, eps=1e-5):
    """Pure-JAX reference matching the PyTorch forward (BN in eval mode)."""
    wp = params["wp"].reshape(params["wp"].shape[0], -1)   # (Cout, Cin)
    wi = params["wi"].reshape(params["wi"].shape[0], -1)
    att = jax.nn.sigmoid(D)
    xp = (1.0 - att) * I + P
    xi = att * P + I

    def conv_bn(x, w, g, b, m, v):
        y = jnp.einsum("nchw,oc->nohw", x, w,
                       precision=jax.lax.Precision.HIGHEST)
        scale = g / jnp.sqrt(v + eps)
        shift = b - m * scale
        return y * scale[None, :, None, None] + shift[None, :, None, None]

    p_add = conv_bn(xp, wp, params["gamma_p"], params["beta_p"],
                    params["mean_p"], params["var_p"])
    i_add = conv_bn(xi, wi, params["gamma_i"], params["beta_i"],
                    params["mean_i"], params["var_i"])
    return p_add + i_add


def make_params(key, in_dim, out_dim):
    ks = jax.random.split(key, 8)
    return {
        "wp": jax.random.normal(ks[0], (out_dim, in_dim, 1, 1), jnp.float32) * 0.1,
        "wi": jax.random.normal(ks[1], (out_dim, in_dim, 1, 1), jnp.float32) * 0.1,
        "gamma_p": 1.0 + 0.1 * jax.random.normal(ks[2], (out_dim,), jnp.float32),
        "beta_p": 0.1 * jax.random.normal(ks[3], (out_dim,), jnp.float32),
        "mean_p": 0.1 * jax.random.normal(ks[4], (out_dim,), jnp.float32),
        "var_p": 1.0 + 0.1 * jnp.abs(jax.random.normal(ks[5], (out_dim,), jnp.float32)),
        "gamma_i": 1.0 + 0.1 * jax.random.normal(ks[6], (out_dim,), jnp.float32),
        "beta_i": 0.1 * jax.random.normal(ks[7], (out_dim,), jnp.float32),
        "mean_i": jnp.zeros((out_dim,), jnp.float32),
        "var_i": jnp.ones((out_dim,), jnp.float32),
    }


if __name__ == "__main__":
    key = jax.random.PRNGKey(0)
    kP, kI, kD, kparam = jax.random.split(key, 4)

    N, Cin, H, W = 2, 4, 16, 16
    Cout = 8

    P = jax.random.normal(kP, (N, Cin, H, W), jnp.float32)
    I = jax.random.normal(kI, (N, Cin, H, W), jnp.float32)
    D = jax.random.normal(kD, (N, Cin, H, W), jnp.float32)
    params = make_params(kparam, Cin, Cout)

    out = lightbag_forward(P, I, D, params)
    out = jax.block_until_ready(out)

    ref = lightbag_reference(P, I, D, params)
    assert out.shape == (N, Cout, H, W), out.shape
    assert jnp.allclose(out, ref, atol=1e-4, rtol=1e-4), \
        float(jnp.max(jnp.abs(out - ref)))

    print("KERNEL_OK")
</pallas_src>

<mosaic_0001>
module attributes {stable_mosaic.version = 11 : i64} {
  func.func @_lightbag_kernel(%arg0: i32, %arg1: i32, %arg2: memref<1x4x256xf32, #tpu.memory_space<vmem>>, %arg3: memref<1x4x256xf32, #tpu.memory_space<vmem>>, %arg4: memref<1x4x256xf32, #tpu.memory_space<vmem>>, %arg5: memref<8x4xf32, #tpu.memory_space<vmem>>, %arg6: memref<8x4xf32, #tpu.memory_space<vmem>>, %arg7: memref<8x1xf32, #tpu.memory_space<vmem>>, %arg8: memref<1x8x256xf32, #tpu.memory_space<vmem>>) attributes {dimension_semantics = [#tpu.dimension_semantics<parallel>, #tpu.dimension_semantics<parallel>], iteration_bounds = array<i64: 2, 1>, scalar_prefetch = 0 : i64, scratch_operands = 0 : i64, tpu.core_type = #tpu.core_type<tc>, window_params = [{transform_indices = @transform_0, window_bounds = array<i64: 1, 4, 256>}, {transform_indices = @transform_1, window_bounds = array<i64: 1, 4, 256>}, {transform_indices = @transform_2, window_bounds = array<i64: 1, 4, 256>}, {pipeline_mode = #tpu.pipeline_mode<synchronous>, transform_indices = @transform_3, window_bounds = array<i64: 8, 4>}, {pipeline_mode = #tpu.pipeline_mode<synchronous>, transform_indices = @transform_4, window_bounds = array<i64: 8, 4>}, {pipeline_mode = #tpu.pipeline_mode<synchronous>, transform_indices = @transform_5, window_bounds = array<i64: 8, 1>}, {transform_indices = @transform_6, window_bounds = array<i64: 1, 8, 256>}]} {
    %c0 = arith.constant 0 : index
    %c0_0 = arith.constant 0 : index
    %c0_1 = arith.constant 0 : index
    %0 = vector.load %arg2[%c0, %c0_0, %c0_1] : memref<1x4x256xf32, #tpu.memory_space<vmem>>, vector<1x4x256xf32>
    %1 = vector.shape_cast %0 : vector<1x4x256xf32> to vector<4x256xf32>
    %c0_2 = arith.constant 0 : index
    %c0_3 = arith.constant 0 : index
    %c0_4 = arith.constant 0 : index
    %2 = vector.load %arg3[%c0_2, %c0_3, %c0_4] : memref<1x4x256xf32, #tpu.memory_space<vmem>>, vector<1x4x256xf32>
    %3 = vector.shape_cast %2 : vector<1x4x256xf32> to vector<4x256xf32>
    %c0_5 = arith.constant 0 : index
    %c0_6 = arith.constant 0 : index
    %c0_7 = arith.constant 0 : index
    %4 = vector.load %arg4[%c0_5, %c0_6, %c0_7] : memref<1x4x256xf32, #tpu.memory_space<vmem>>, vector<1x4x256xf32>
    %5 = vector.shape_cast %4 : vector<1x4x256xf32> to vector<4x256xf32>
    %6 = arith.negf %5 : vector<4x256xf32>
    %7 = math.exp %6 : vector<4x256xf32>
    %cst = arith.constant 1.000000e+00 : f32
    %8 = vector.broadcast %cst : f32 to vector<4x256xf32>
    %9 = arith.addf %8, %7 : vector<4x256xf32>
    %10 = arith.divf %8, %9 : vector<4x256xf32>
    %cst_8 = arith.constant 1.000000e+00 : f32
    %11 = vector.broadcast %cst_8 : f32 to vector<4x256xf32>
    %12 = arith.subf %11, %10 : vector<4x256xf32>
    %13 = arith.mulf %12, %3 : vector<4x256xf32>
    %14 = arith.addf %13, %1 : vector<4x256xf32>
    %15 = arith.mulf %10, %1 : vector<4x256xf32>
    %16 = arith.addf %15, %3 : vector<4x256xf32>
    %c0_9 = arith.constant 0 : index
    %c0_10 = arith.constant 0 : index
    %17 = vector.load %arg5[%c0_9, %c0_10] : memref<8x4xf32, #tpu.memory_space<vmem>>, vector<8x4xf32>
    %cst_11 = arith.constant dense<0.000000e+00> : vector<8x256xf32>
    %18 = tpu.matmul %17, %14, %cst_11 {dimension_numbers = #tpu.dot_dimension_numbers<[1], [0], [0], [1], [0, 0, 1, 1], [], []>, precision = #tpu.contract_precision<fp32>} : vector<8x4xf32>, vector<4x256xf32>, vector<8x256xf32> -> vector<8x256xf32>
    %c0_12 = arith.constant 0 : index
    %c0_13 = arith.constant 0 : index
    %19 = vector.load %arg6[%c0_12, %c0_13] : memref<8x4xf32, #tpu.memory_space<vmem>>, vector<8x4xf32>
    %cst_14 = arith.constant dense<0.000000e+00> : vector<8x256xf32>
    %20 = tpu.matmul %19, %16, %cst_14 {dimension_numbers = #tpu.dot_dimension_numbers<[1], [0], [0], [1], [0, 0, 1, 1], [], []>, precision = #tpu.contract_precision<fp32>} : vector<8x4xf32>, vector<4x256xf32>, vector<8x256xf32> -> vector<8x256xf32>
    %21 = arith.addf %18, %20 : vector<8x256xf32>
    %c0_15 = arith.constant 0 : index
    %c0_16 = arith.constant 0 : index
    %22 = vector.load %arg7[%c0_15, %c0_16] : memref<8x1xf32, #tpu.memory_space<vmem>>, vector<8x1xf32>
    %23 = vector.broadcast %22 : vector<8x1xf32> to vector<8x256xf32>
    %24 = arith.addf %21, %23 : vector<8x256xf32>
    %c0_17 = arith.constant 0 : index
    %c0_18 = arith.constant 0 : index
    %c0_19 = arith.constant 0 : index
    %25 = vector.load %arg8[%c0_17, %c0_18, %c0_19] : memref<1x8x256xf32, #tpu.memory_space<vmem>>, vector<1x8x256xf32>
    %26 = vector.shape_cast %25 : vector<1x8x256xf32> to vector<8x256xf32>
    %27 = vector.shape_cast %24 : vector<8x256xf32> to vector<1x8x256xf32>
    tpu.vector_store %arg8[%c0_17, %c0_18, %c0_19], %27 {strides = array<i32>} : memref<1x8x256xf32, #tpu.memory_space<vmem>>, vector<1x8x256xf32>,
    return
  }
  func.func @transform_0(%arg0: i32, %arg1: i32) -> (i32, i32, i32) {
    %c0_i32 = arith.constant 0 : i32
    %c0_i32_0 = arith.constant 0 : i32
    return %arg0, %c0_i32, %arg1 : i32, i32, i32
  }
  func.func @transform_1(%arg0: i32, %arg1: i32) -> (i32, i32, i32) {
    %c0_i32 = arith.constant 0 : i32
    %c0_i32_0 = arith.constant 0 : i32
    return %arg0, %c0_i32, %arg1 : i32, i32, i32
  }
  func.func @transform_2(%arg0: i32, %arg1: i32) -> (i32, i32, i32) {
    %c0_i32 = arith.constant 0 : i32
    %c0_i32_0 = arith.constant 0 : i32
    return %arg0, %c0_i32, %arg1 : i32, i32, i32
  }
  func.func @transform_3(%arg0: i32, %arg1: i32) -> (i32, i32) {
    %c0_i32 = arith.constant 0 : i32
    %c0_i32_0 = arith.constant 0 : i32
    %c0_i32_1 = arith.constant 0 : i32
    return %c0_i32, %c0_i32_0 : i32, i32
  }
  func.func @transform_4(%arg0: i32, %arg1: i32) -> (i32, i32) {
    %c0_i32 = arith.constant 0 : i32
    %c0_i32_0 = arith.constant 0 : i32
    %c0_i32_1 = arith.constant 0 : i32
    return %c0_i32, %c0_i32_0 : i32, i32
  }
  func.func @transform_5(%arg0: i32, %arg1: i32) -> (i32, i32) {
    %c0_i32 = arith.constant 0 : i32
    %c0_i32_0 = arith.constant 0 : i32
    %c0_i32_1 = arith.constant 0 : i32
    return %c0_i32, %c0_i32_0 : i32, i32
  }
  func.func @transform_6(%arg0: i32, %arg1: i32) -> (i32, i32, i32) {
    %c0_i32 = arith.constant 0 : i32
    %c0_i32_0 = arith.constant 0 : i32
    return %arg0, %c0_i32, %arg1 : i32, i32, i32
  }
}

</mosaic_0001>

<llo_original>
// kernel: tpu_custom_call.1
$region0: #{tpu_custom_call.1}
  #allocation0 [shape = 'u32[]', space=smem, size = 0x4, offset = 0x4, fixed_abs, tag = 'smem constant byte address 0x4 - core index']
  #allocation1 [shape = 'u32[72,128]{1,0:T(1,128)}', space=vmem, size = 0x9000, scoped, tag = 'internal scratch']
  %s0 = inlined_call_operand.vmem [shape: f32[2,4,256], index: 0, kind: input, shape index: {}]
  %s1 = inlined_call_operand.hbm [shape: f32[2,4,256], index: 1, kind: input, shape index: {}]
  %s2 = inlined_call_operand.hbm [shape: f32[2,4,256], index: 2, kind: input, shape index: {}]
  %s3 = inlined_call_operand.vmem [shape: f32[8,4], index: 3, kind: input, shape index: {}]
  %s4 = inlined_call_operand.vmem [shape: f32[8,4], index: 4, kind: input, shape index: {}]
  %s5 = inlined_call_operand.vmem [shape: f32[8,1], index: 5, kind: input, shape index: {}]
  %s6 = inlined_call_operand.hbm [shape: f32[2,8,256], index: 6, kind: output, shape index: {}]
  %s7 = sld [smem:[#allocation0]]
  $region65: #{tpu_custom_call.1} parent=0
    _
  %s9 = ssub.s32 1, %s7
  %s10 = scalar_select 0, %s9, %s7
  $region1: #{tpu_custom_call.1} parent=0
    #allocation2 [shape = 'u8[8192]{0}', space=vmem, size = 0x2000, scoped, tag = 'input window, operand 1']
    #allocation3 [shape = 's32[2]{0}', space=sflag, size = 0x8, scoped, tag = 'scoped memory for tpu_custom_call.1']
    #allocation4 [shape = 's32[2]{0}', space=sflag, size = 0x8, scoped, tag = 'scoped memory for tpu_custom_call.1']
    #allocation5 [shape = 'u8[8192]{0}', space=vmem, size = 0x2000, scoped, tag = 'input window, operand 2']
    #allocation6 [shape = 's32[2]{0}', space=sflag, size = 0x8, scoped, tag = 'scoped memory for tpu_custom_call.1']
    #allocation7 [shape = 'u8[16384]{0}', space=vmem, size = 0x4000, scoped, tag = 'output window, operand 0']
    %11 = vsyncpa [#allocation3], 0
    %s12 = scalar_lea.sflag [#allocation3], 1
    %13 = vsyncpa %s12, 0
    %14 = vsyncpa [#allocation6], 0
    %s15 = scalar_lea.sflag [#allocation6], 1
    %16 = vsyncpa %s15, 0
    %17 = vsyncpa [#allocation4], 0
    %s18 = scalar_lea.sflag [#allocation4], 1
    %19 = vsyncpa %s18, 0
    loop: start=0, step=1, limit=4
    $region2: #{tpu_custom_call.1} parent=1 // loop_pre_header
      _
    $region3: #{tpu_custom_call.1} parent=1 // loop_header
      %s21 = sphi 0, %s25
      %p22 = scmp.ge.s32.totalorder %s21, 4
      %s28 = sphi 0, %s40
      %s29 = sphi 0, %s36
      %s30 = sphi 0, %s28
      %s31 = sphi 0, %s29
      %s32 = sphi 0, %s30
      %s33 = sphi 0, %s31
      %s45 = sphi 0, %s47
      %s48 = sphi 0, %s45
      %s49 = sphi 0, %s48
      %s65 = sphi 0, %s49
      %s73 = sphi 0, %s75
      %s76 = sphi 0, %s73
      %s77 = sphi 0, %s76
      %s93 = sphi 0, %s77
      %s101 = sphi 0, %s103
      %s104 = sphi 0, %s101
      %s105 = sphi 0, %s104
      %s121 = sphi 0, %s105
      %s125 = sphi 0, %s125
      %s127 = sphi 0, %s125
      %s128 = sphi 0, %s127
      %s142 = sphi 0, %s128
      %s146 = sphi 0, %s146
      %s148 = sphi 0, %s146
      %s149 = sphi 0, %s148
      %s163 = sphi 0, %s149
      %s167 = sphi 0, %s167
      %s169 = sphi 0, %s167
      %s170 = sphi 0, %s169
      %s184 = sphi 0, %s170
      %s192 = sphi 0, %s194
      %s195 = sphi 0, %s192
      %s196 = sphi 0, %s195
      %s212 = sphi 0, %s196
    $region4: #{tpu_custom_call.1} parent=1 // loop_header_branch
      %24 = sbr.rel (%p22) target = $region8
    $region5: #{tpu_custom_call.1} parent=1 // loop_body
      %s26 = ssub.s32 %s21, 1
      %s27 = ssub.s32 %s21, 2
      %s34 = sadd.s32 1, %s29
      %p35 = scmp.ge.s32.totalorder %s34, 1
      %s36 = scalar_select %p35, 0, %s34
      %s37 = sadd.s32 1, %s28
      %s38 = scalar_select %p35, %s37, %s28
      %p39 = scmp.ge.s32.totalorder %s38, 2
      %s40 = scalar_select %p39, 0, %s38
      %s41 = ssub.s32 %s28, %s40
      %s42 = ssub.s32 %s29, %s36
      %s43 = sor.u32 %s41, %s42
      %p44 = scmp.eq.s32.totalorder %s43, 0
      %s46 = sadd.s32 %s45, 1
      %s47 = scalar_select %p44, %s45, %s46
      %p50 = pneg %p44
      %p51 = scmp.eq.s32.totalorder %s21, 1
      %p52 = por %p50, %p51
      %p53 = scmp.ne.s32.totalorder %s45, %s48
      %p54 = scmp.eq.s32.totalorder %s21, 0
      %p55 = por %p53, %p54
      %p56 = scmp.ne.s32.totalorder %s45, %s48
      %p57 = scmp.eq.s32.totalorder %s26, 1
      %p58 = por %p56, %p57
      %p59 = scmp.ne.s32.totalorder %s48, %s49
      %p60 = scmp.eq.s32.totalorder %s26, 0
      %p61 = por %p59, %p60
      %p62 = scmp.ne.s32.totalorder %s48, %s49
      %p63 = scmp.eq.s32.totalorder %s27, 1
      %p64 = por %p62, %p63
      %p66 = scmp.ne.s32.totalorder %s49, %s65
      %p67 = scmp.eq.s32.totalorder %s27, 0
      %p68 = por %p66, %p67
      %s69 = ssub.s32 %s28, %s40
      %s70 = ssub.s32 %s29, %s36
      %s71 = sor.u32 %s69, %s70
      %p72 = scmp.eq.s32.totalorder %s71, 0
      %s74 = sadd.s32 %s73, 1
      %s75 = scalar_select %p72, %s73, %s74
      %p78 = pneg %p72
      %p79 = scmp.eq.s32.totalorder %s21, 1
      %p80 = por %p78, %p79
      %p81 = scmp.ne.s32.totalorder %s73, %s76
      %p82 = scmp.eq.s32.totalorder %s21, 0
      %p83 = por %p81, %p82
      %p84 = scmp.ne.s32.totalorder %s73, %s76
      %p85 = scmp.eq.s32.totalorder %s26, 1
      %p86 = por %p84, %p85
      %p87 = scmp.ne.s32.totalorder %s76, %s77
      %p88 = scmp.eq.s32.totalorder %s26, 0
      %p89 = por %p87, %p88
      %p90 = scmp.ne.s32.totalorder %s76, %s77
      %p91 = scmp.eq.s32.totalorder %s27, 1
      %p92 = por %p90, %p91
      %p94 = scmp.ne.s32.totalorder %s77, %s93
      %p95 = scmp.eq.s32.totalorder %s27, 0
      %p96 = por %p94, %p95
      %s97 = ssub.s32 %s28, %s40
      %s98 = ssub.s32 %s29, %s36
      %s99 = sor.u32 %s97, %s98
      %p100 = scmp.eq.s32.totalorder %s99, 0
      %s102 = sadd.s32 %s101, 1
      %s103 = scalar_select %p100, %s101, %s102
      %p106 = pneg %p100
      %p107 = scmp.eq.s32.totalorder %s21, 1
      %p108 = por %p106, %p107
      %p109 = scmp.ne.s32.totalorder %s101, %s104
      %p110 = scmp.eq.s32.totalorder %s21, 0
      %p111 = por %p109, %p110
      %p112 = scmp.ne.s32.totalorder %s101, %s104
      %p113 = scmp.eq.s32.totalorder %s26, 1
      %p114 = por %p112, %p113
      %p115 = scmp.ne.s32.totalorder %s104, %s105
      %p116 = scmp.eq.s32.totalorder %s26, 0
      %p117 = por %p115, %p116
      %p118 = scmp.ne.s32.totalorder %s104, %s105
      %p119 = scmp.eq.s32.totalorder %s27, 1
      %p120 = por %p118, %p119
      %p122 = scmp.ne.s32.totalorder %s105, %s121
      %p123 = scmp.eq.s32.totalorder %s27, 0
      %p124 = por %p122, %p123
      %s126 = sadd.s32 %s125, 1
      %p129 = scmp.eq.s32.totalorder %s21, 1
      %p130 = scmp.ne.s32.totalorder %s125, %s127
      %p131 = scmp.eq.s32.totalorder %s21, 0
      %p132 = por %p130, %p131
      %p133 = scmp.ne.s32.totalorder %s125, %s127
      %p134 = scmp.eq.s32.totalorder %s26, 1
      %p135 = por %p133, %p134
      %p136 = scmp.ne.s32.totalorder %s127, %s128
      %p137 = scmp.eq.s32.totalorder %s26, 0
      %p138 = por %p136, %p137
      %p139 = scmp.ne.s32.totalorder %s127, %s128
      %p140 = scmp.eq.s32.totalorder %s27, 1
      %p141 = por %p139, %p140
      %p143 = scmp.ne.s32.totalorder %s128, %s142
      %p144 = scmp.eq.s32.totalorder %s27, 0
      %p145 = por %p143, %p144
      %s147 = sadd.s32 %s146, 1
      %p150 = scmp.eq.s32.totalorder %s21, 1
      %p151 = scmp.ne.s32.totalorder %s146, %s148
      %p152 = scmp.eq.s32.totalorder %s21, 0
      %p153 = por %p151, %p152
      %p154 = scmp.ne.s32.totalorder %s146, %s148
      %p155 = scmp.eq.s32.totalorder %s26, 1
      %p156 = por %p154, %p155
      %p157 = scmp.ne.s32.totalorder %s148, %s149
      %p158 = scmp.eq.s32.totalorder %s26, 0
      %p159 = por %p157, %p158
      %p160 = scmp.ne.s32.totalorder %s148, %s149
      %p161 = scmp.eq.s32.totalorder %s27, 1
      %p162 = por %p160, %p161
      %p164 = scmp.ne.s32.totalorder %s149, %s163
      %p165 = scmp.eq.s32.totalorder %s27, 0
      %p166 = por %p164, %p165
      %s168 = sadd.s32 %s167, 1
      %p171 = scmp.eq.s32.totalorder %s21, 1
      %p172 = scmp.ne.s32.totalorder %s167, %s169
      %p173 = scmp.eq.s32.totalorder %s21, 0
      %p174 = por %p172, %p173
      %p175 = scmp.ne.s32.totalorder %s167, %s169
      %p176 = scmp.eq.s32.totalorder %s26, 1
      %p177 = por %p175, %p176
      %p178 = scmp.ne.s32.totalorder %s169, %s170
      %p179 = scmp.eq.s32.totalorder %s26, 0
      %p180 = por %p178, %p179
      %p181 = scmp.ne.s32.totalorder %s169, %s170
      %p182 = scmp.eq.s32.totalorder %s27, 1
      %p183 = por %p181, %p182
      %p185 = scmp.ne.s32.totalorder %s170, %s184
      %p186 = scmp.eq.s32.totalorder %s27, 0
      %p187 = por %p185, %p186
      %s188 = ssub.s32 %s28, %s40
      %s189 = ssub.s32 %s29, %s36
      %s190 = sor.u32 %s188, %s189
      %p191 = scmp.eq.s32.totalorder %s190, 0
      %s193 = sadd.s32 %s192, 1
      %s194 = scalar_select %p191, %s192, %s193
      %p197 = pneg %p191
      %p198 = scmp.eq.s32.totalorder %s21, 1
      %p199 = por %p197, %p198
      %p200 = scmp.ne.s32.totalorder %s192, %s195
      %p201 = scmp.eq.s32.totalorder %s21, 0
      %p202 = por %p200, %p201
      %p203 = scmp.ne.s32.totalorder %s192, %s195
      %p204 = scmp.eq.s32.totalorder %s26, 1
      %p205 = por %p203, %p204
      %p206 = scmp.ne.s32.totalorder %s195, %s196
      %p207 = scmp.eq.s32.totalorder %s26, 0
      %p208 = por %p206, %p207
      %p209 = scmp.ne.s32.totalorder %s195, %s196
      %p210 = scmp.eq.s32.totalorder %s27, 1
      %p211 = por %p209, %p210
      %p213 = scmp.ne.s32.totalorder %s196, %s212
      %p214 = scmp.eq.s32.totalorder %s27, 0
      %p215 = por %p213, %p214
      %p216 = scmp.le.s32.totalorder 1, %s21
      %p217 = scmp.lt.s32.totalorder %s21, 3
      %p218 = pnand %p216, %p217
      %p219 = pneg %p218
      // Predicated region
      $region9: #{tpu_custom_call.1} parent=5 // pred_check
        _
      $region10: #{tpu_custom_call.1} parent=5 // pred_check_branch
        %221 = sbr.rel (%p218) target = $region12
      $region11: #{tpu_custom_call.1} parent=5 // pred_region
        %s222 = ssub.s32 %s21, 1
        // Predicated region
        $region13: #{tpu_custom_call.1} parent=11 // pred_check
          %p223 = pneg %p138
        $region14: #{tpu_custom_call.1} parent=11 // pred_check_branch
          %225 = sbr.rel (%p223) target = $region16
        $region15: #{tpu_custom_call.1} parent=11 // pred_region
          _
        $region16: #{tpu_custom_call.1} parent=11 // pred_fallthru
          _
        // Predicated region
        $region17: #{tpu_custom_call.1} parent=11 // pred_check
          %p226 = pneg %p159
        $region18: #{tpu_custom_call.1} parent=11 // pred_check_branch
          %228 = sbr.rel (%p226) target = $region20
        $region19: #{tpu_custom_call.1} parent=11 // pred_region
          _
        $region20: #{tpu_custom_call.1} parent=11 // pred_fallthru
          _
        // Predicated region
        $region21: #{tpu_custom_call.1} parent=11 // pred_check
          %p229 = pneg %p180
        $region22: #{tpu_custom_call.1} parent=11 // pred_check_branch
          %231 = sbr.rel (%p229) target = $region24
        $region23: #{tpu_custom_call.1} parent=11 // pred_region
          _
        $region24: #{tpu_custom_call.1} parent=11 // pred_fallthru
          _
      $region12: #{tpu_custom_call.1} parent=5 // pred_fallthru
        _
      %p232 = scmp.lt.s32.totalorder %s21, 2
      // Predicated region
      $region25: #{tpu_custom_call.1} parent=5 // pred_check
        %p233 = pneg %p232
      $region26: #{tpu_custom_call.1} parent=5 // pred_check_branch
        %235 = sbr.rel (%p233) target = $region28
      $region27: #{tpu_custom_call.1} parent=5 // pred_region
        // Predicated region
        $region29: #{tpu_custom_call.1} parent=27 // pred_check
          %p236 = pneg %p55
        $region30: #{tpu_custom_call.1} parent=27 // pred_check_branch
          %238 = sbr.rel (%p236) target = $region32
        $region31: #{tpu_custom_call.1} parent=27 // pred_region
          %s239 = smul.u32 2, %s29
          %p240 = scmp.lt.s32.totalorder %s28, 1
          %s241 = scalar_select %p240, %s28, 1
          %p242 = scmp.lt.s32.totalorder %s239, 1
          %s243 = scalar_select %p242, %s239, 1
          %s244 = smul.addr %s241, 2
          %s245 = sadd.s32 %s243, %s244
          %s246 = smul.addr %s245, 4
          %s247 = scalar_lea.vmem %s0, %s246
          %s248 = smul.u32 2, %s29
        $region32: #{tpu_custom_call.1} parent=27 // pred_fallthru
          _
        // Predicated region
        $region33: #{tpu_custom_call.1} parent=27 // pred_check
          %p249 = pneg %p83
        $region34: #{tpu_custom_call.1} parent=27 // pred_check_branch
          %251 = sbr.rel (%p249) target = $region36
        $region35: #{tpu_custom_call.1} parent=27 // pred_region
          %s252 = sand.u32 %s73, 1
          %s253 = scalar_lea.sflag [#allocation3], %s252
          %s254 = sand.u32 %s73, 1
          %s255 = smul.addr %s254, 8
          %s256 = scalar_lea.vmem [#allocation2], %s255
          %s257 = smul.u32 2, %s29
          %259 = vsyncadd %s253, 0
          %s260 = smul.addr %s28, 2
          %s261 = sadd.s32 %s257, %s260
          %s262 = smul.addr %s261, 4
          %s263 = scalar_lea.hbm %s1, %s262
          %s265 = sshll.u32 %s263, 4
          %s266 = int_to_ptr.hbm [resolvable:$true] %s265
          %s267 = sshll.u32 %s256, 4
          %s268 = int_to_ptr.vmem [resolvable:$true] %s267
          %270 = dma.hbm_to_vmem [thread:$0]  %s266, 128, %s268, %s253
        $region36: #{tpu_custom_call.1} parent=27 // pred_fallthru
          _
        // Predicated region
        $region37: #{tpu_custom_call.1} parent=27 // pred_check
          %p271 = pneg %p111
        $region38: #{tpu_custom_call.1} parent=27 // pred_check_branch
          %273 = sbr.rel (%p271) target = $region40
        $region39: #{tpu_custom_call.1} parent=27 // pred_region
          %s274 = sand.u32 %s101, 1
          %s275 = scalar_lea.sflag [#allocation6], %s274
          %s276 = sand.u32 %s101, 1
          %s277 = smul.addr %s276, 8
          %s278 = scalar_lea.vmem [#allocation5], %s277
          %s279 = smul.u32 2, %s29
          %281 = vsyncadd %s275, 0
          %s282 = smul.addr %s28, 2
          %s283 = sadd.s32 %s279, %s282
          %s284 = smul.addr %s283, 4
          %s285 = scalar_lea.hbm %s2, %s284
          %s287 = sshll.u32 %s285, 4
          %s288 = int_to_ptr.hbm [resolvable:$true] %s287
          %s289 = sshll.u32 %s278, 4
          %s290 = int_to_ptr.vmem [resolvable:$true] %s289
          %292 = dma.hbm_to_vmem [thread:$0]  %s288, 128, %s290, %s275
        $region40: #{tpu_custom_call.1} parent=27 // pred_fallthru
          _
      $region28: #{tpu_custom_call.1} parent=5 // pred_fallthru
        _
      %p293 = scmp.le.s32.totalorder 1, %s21
      %p294 = scmp.lt.s32.totalorder %s21, 3
      %p295 = pnand %p293, %p294
      %p296 = pneg %p295
      // Predicated region
      $region41: #{tpu_custom_call.1} parent=5 // pred_check
        _
      $region42: #{tpu_custom_call.1} parent=5 // pred_check_branch
        %298 = sbr.rel (%p295) target = $region44
      $region43: #{tpu_custom_call.1} parent=5 // pred_region
        %s299 = ssub.s32 %s21, 1
        %s300 = sand.u32 %s76, 1
        %s301 = scalar_lea.sflag [#allocation3], %s300
        %s302 = sand.u32 %s76, 1
        %s303 = smul.addr %s302, 8
        %s304 = scalar_lea.vmem [#allocation2], %s303
        // Predicated region
        $region45: #{tpu_custom_call.1} parent=43 // pred_check
          %p305 = pneg %p89
        $region46: #{tpu_custom_call.1} parent=43 // pred_check_branch
          %307 = sbr.rel (%p305) target = $region48
        $region47: #{tpu_custom_call.1} parent=43 // pred_region
          %309 = dma.done %s301, 128
        $region48: #{tpu_custom_call.1} parent=43 // pred_fallthru
          _
        %s310 = sand.u32 %s104, 1
        %s311 = scalar_lea.sflag [#allocation6], %s310
        %s312 = sand.u32 %s104, 1
        %s313 = smul.addr %s312, 8
        %s314 = scalar_lea.vmem [#allocation5], %s313
        // Predicated region
        $region49: #{tpu_custom_call.1} parent=43 // pred_check
          %p315 = pneg %p117
        $region50: #{tpu_custom_call.1} parent=43 // pred_check_branch
          %317 = sbr.rel (%p315) target = $region52
        $region51: #{tpu_custom_call.1} parent=43 // pred_region
          %319 = dma.done %s311, 128
        $region52: #{tpu_custom_call.1} parent=43 // pred_fallthru
          _
        %s320 = smul.u32 2, %s31
        %p321 = scmp.lt.s32.totalorder %s30, 1
        %s322 = scalar_select %p321, %s30, 1
        %p323 = scmp.lt.s32.totalorder %s320, 1
        %s324 = scalar_select %p323, %s320, 1
        %s325 = smul.addr %s322, 2
        %s326 = sadd.s32 %s324, %s325
        %s327 = smul.addr %s326, 4
        %s328 = scalar_lea.vmem %s0, %s327
        %p329 = pneg %p61
        %p330 = pneg %p58
        %s331 = sand.u32 %s76, 1
        %s332 = scalar_lea.sflag [#allocation3], %s331
        %s333 = sand.u32 %s76, 1
        %s334 = smul.addr %s333, 8
        %s335 = scalar_lea.vmem [#allocation2], %s334
        %p336 = pneg %p89
        %p337 = pneg %p86
        %s338 = sand.u32 %s104, 1
        %s339 = scalar_lea.sflag [#allocation6], %s338
        %s340 = sand.u32 %s104, 1
        %s341 = smul.addr %s340, 8
        %s342 = scalar_lea.vmem [#allocation5], %s341
        %p343 = pneg %p117
        %p344 = pneg %p114
        %p345 = pneg %p138
        %p346 = pneg %p135
        %p347 = pneg %p159
        %p348 = pneg %p156
        %p349 = pneg %p180
        %p350 = pneg %p177
        %p351 = pneg %p208
        %p352 = pneg %p205
        %s353 = sand.u32 %s195, 1
        %s354 = scalar_lea.sflag [#allocation4], %s353
        %s355 = sand.u32 %s195, 1
        %s356 = smul.addr %s355, 16
        %s357 = scalar_lea.vmem [#allocation7], %s356
        %s358 = smul.u32 2, %s31
        %p359 = scmp.lt.s32.totalorder %s30, 1
        %s360 = scalar_select %p359, %s30, 1
        %p361 = scmp.lt.s32.totalorder %s358, 1
        %s362 = scalar_select %p361, %s358, 1
        %s363 = smul.addr %s360, 2
        %s364 = sadd.s32 %s362, %s363
        %s365 = smul.addr %s364, 4
        %s366 = scalar_lea.vmem %s0, %s365
        %s367 = smul.u32 2, %s31
        %s368 = smul.u32 2, %s31
        %s369 = smul.u32 2, %s31
        %s370 = smul.u32 2, %s31
        %v371 = vld [vmem:[%s366] sm:$0xff]
        %v372 = vld [vmem:[%s304] sm:$0xff]
        %v373 = vld [vmem:[%s314] sm:$0xff]
        %v374 = vxor.u32 %v373, 2147483648
        %v375 = vmul.f32 %v374, 1.442695
        %v376 = vpow.pop %v375
        %v377 = vadd.f32 %v376, 1.0
        %v378 = vrcp.pop %v377
        %v379 = vmul.f32 %v377, %v378
        %v380 = vsub.f32 1.0, %v379
        %v381 = vmul.f32 %v378, %v380
        %v382 = vadd.f32 %v378, %v381
        %vm383 = vweird.f32 %v377
        %vm384 = vweird.f32 %v378
        %vm385 = vmor %vm383, %vm384
        %v386 = vsel %vm385, %v378, %v382
        %v387 = vand.u32 2147483647, %v377
        %vm388 = vcmp.eq.f32.partialorder %v387, 8.507059e+37
        %v389 = vand.u32 %v377, 2147483648
        %v390 = vor.u32 1.1754944e-38, %v389
        %v391 = vsel %vm388, %v390, %v386
        %v392 = vmul.f32 1.0, %v391
        %v393 = vsub.f32 1.0, %v392
        %v394 = vmul.f32 %v393, %v372
        %v395 = vadd.f32 %v394, %v371
        %v396 = vmul.f32 %v392, %v371
        %v397 = vadd.f32 %v396, %v372
        %v398 = vld [vmem:[%s3] sm:$0xff]
        %v399 = vld [vmem:[%s4] sm:$0xff]
        %401 = vst [vmem:[#allocation1] ss:$2 sm:$0xff] %v397
        %v402 = vld.sshfl [vmem:[#allocation1] sm:$0xff pattern:$0x75316420]
        %v403 = vld.sshfl [vmem:[#allocation1 + $0x8] sm:$0xff pattern:$0x75316420]
        %vm404 = vcmask 31744
        %v406 = vsel %vm404, %v399, 0
        %vm408 = vcmask 1043456
        %v409 = vsel %vm408, %v402, 0
        %v411 = vsel %vm408, %v403, 0
        %413 = vmatpush.msra.mxu0 0.0
        %414 = vmatpush.msra.mxu0 0.0
        %415 = vmatpush.msra.mxu0 0.0
        %416 = vmatpush.msra.mxu0 0.0
        %417 = vmatpush.msra.mxu0 0.0
        %418 = vmatpush.msra.mxu0 0.0
        %419 = vmatpush.msra.mxu0 0.0
        %420 = vmatpush.msra.mxu0 0.0
        %421 = vmatpush.msra.mxu0 0.0
        %422 = vmatpush.msra.mxu0 0.0
        %423 = vmatpush.msra.mxu0 0.0
        %424 = vmatpush.msra.mxu0 0.0
        %425 = vmatpush.msra.mxu0 0.0
        %426 = vmatpush.msra.mxu0 0.0
        %427 = vmatpush.msra.mxu0 0.0
        %v428 = vand.u32 %v409, 4294901760
        %429 = vmatpush.msra.mxu0 %v428
        %v430 = vand.u32 %v406, 4294901760
        %v431 = vsub.f32 %v406, %v430
        %v432 = vand.u32 %v431, 4294901760
        %v433 = vsub.f32 %v431, %v432
        %v434 = vand.u32 %v433, 4294901760
        %435 = vmatmul.f32.gmra.mxu0 %v434
        %v436 = vpop.f32.mrf.mxu0
        %v437 = vadd.f32 0.0, %v436
        %438 = vdwg.mxu0
        %439 = vmatpush.msra.mxu0 0.0
        %440 = vmatpush.msra.mxu0 0.0
        %441 = vmatpush.msra.mxu0 0.0
        %442 = vmatpush.msra.mxu0 0.0
        %443 = vmatpush.msra.mxu0 0.0
        %444 = vmatpush.msra.mxu0 0.0
        %445 = vmatpush.msra.mxu0 0.0
        %446 = vmatpush.msra.mxu0 0.0
        %447 = vmatpush.msra.mxu0 0.0
        %448 = vmatpush.msra.mxu0 0.0
        %449 = vmatpush.msra.mxu0 0.0
        %450 = vmatpush.msra.mxu0 0.0
        %451 = vmatpush.msra.mxu0 0.0
        %452 = vmatpush.msra.mxu0 0.0
        %453 = vmatpush.msra.mxu0 0.0
        %v454 = vand.u32 %v409, 4294901760
        %v455 = vsub.f32 %v409, %v454
        %v456 = vand.u32 %v455, 4294901760
        %v457 = vsub.f32 %v455, %v456
        %v458 = vand.u32 %v457, 4294901760
        %459 = vmatpush.msra.mxu0 %v458
        %v460 = vand.u32 %v406, 4294901760
        %461 = vmatmul.f32.gmra.mxu0 %v460
        %v462 = vpop.f32.mrf.mxu0
        %v463 = vadd.f32 %v437, %v462
        %464 = vdwg.mxu0
        %465 = vmatpush.msra.mxu0 0.0
        %466 = vmatpush.msra.mxu0 0.0
        %467 = vmatpush.msra.mxu0 0.0
        %468 = vmatpush.msra.mxu0 0.0
        %469 = vmatpush.msra.mxu0 0.0
        %470 = vmatpush.msra.mxu0 0.0
        %471 = vmatpush.msra.mxu0 0.0
        %472 = vmatpush.msra.mxu0 0.0
        %473 = vmatpush.msra.mxu0 0.0
        %474 = vmatpush.msra.mxu0 0.0
        %475 = vmatpush.msra.mxu0 0.0
        %476 = vmatpush.msra.mxu0 0.0
        %477 = vmatpush.msra.mxu0 0.0
        %478 = vmatpush.msra.mxu0 0.0
        %479 = vmatpush.msra.mxu0 0.0
        %v480 = vand.u32 %v409, 4294901760
        %v481 = vsub.f32 %v409, %v480
        %482 = vmatpush.msra.mxu0 %v481
        %v483 = vand.u32 %v406, 4294901760
        %v484 = vsub.f32 %v406, %v483
        %485 = vmatmul.f32.gmra.mxu0 %v484
        %v486 = vpop.f32.mrf.mxu0
        %v487 = vadd.f32 %v463, %v486
        %488 = vdwg.mxu0
        %489 = vmatpush.msra.mxu0 0.0
        %490 = vmatpush.msra.mxu0 0.0
        %491 = vmatpush.msra.mxu0 0.0
        %492 = vmatpush.msra.mxu0 0.0
        %493 = vmatpush.msra.mxu0 0.0
        %494 = vmatpush.msra.mxu0 0.0
        %495 = vmatpush.msra.mxu0 0.0
        %496 = vmatpush.msra.mxu0 0.0
        %497 = vmatpush.msra.mxu0 0.0
        %498 = vmatpush.msra.mxu0 0.0
        %499 = vmatpush.msra.mxu0 0.0
        %500 = vmatpush.msra.mxu0 0.0
        %501 = vmatpush.msra.mxu0 0.0
        %502 = vmatpush.msra.mxu0 0.0
        %503 = vmatpush.msra.mxu0 0.0
        %v504 = vand.u32 %v409, 4294901760
        %505 = vmatpush.msra.mxu0 %v504
        %v506 = vand.u32 %v406, 4294901760
        %v507 = vsub.f32 %v406, %v506
        %v508 = vand.u32 %v507, 4294901760
        %509 = vmatmul.f32.gmra.mxu0 %v508
        %v510 = vpop.f32.mrf.mxu0
        %v511 = vadd.f32 %v487, %v510
        %512 = vdwg.mxu0
        %513 = vmatpush.msra.mxu0 0.0
        %514 = vmatpush.msra.mxu0 0.0
        %515 = vmatpush.msra.mxu0 0.0
        %516 = vmatpush.msra.mxu0 0.0
        %517 = vmatpush.msra.mxu0 0.0
        %518 = vmatpush.msra.mxu0 0.0
        %519 = vmatpush.msra.mxu0 0.0
        %520 = vmatpush.msra.mxu0 0.0
        %521 = vmatpush.msra.mxu0 0.0
        %522 = vmatpush.msra.mxu0 0.0
        %523 = vmatpush.msra.mxu0 0.0
        %524 = vmatpush.msra.mxu0 0.0
        %525 = vmatpush.msra.mxu0 0.0
        %526 = vmatpush.msra.mxu0 0.0
        %527 = vmatpush.msra.mxu0 0.0
        %v528 = vand.u32 %v409, 4294901760
        %v529 = vsub.f32 %v409, %v528
        %v530 = vand.u32 %v529, 4294901760
        %531 = vmatpush.msra.mxu0 %v530
        %v532 = vand.u32 %v406, 4294901760
        %533 = vmatmul.f32.gmra.mxu0 %v532
        %v534 = vpop.f32.mrf.mxu0
        %v535 = vadd.f32 %v511, %v534
        %536 = vdwg.mxu0
        %537 = vmatpush.msra.mxu0 0.0
        %538 = vmatpush.msra.mxu0 0.0
        %539 = vmatpush.msra.mxu0 0.0
        %540 = vmatpush.msra.mxu0 0.0
        %541 = vmatpush.msra.mxu0 0.0
        %542 = vmatpush.msra.mxu0 0.0
        %543 = vmatpush.msra.mxu0 0.0
        %544 = vmatpush.msra.mxu0 0.0
        %545 = vmatpush.msra.mxu0 0.0
        %546 = vmatpush.msra.mxu0 0.0
        %547 = vmatpush.msra.mxu0 0.0
        %548 = vmatpush.msra.mxu0 0.0
        %549 = vmatpush.msra.mxu0 0.0
        %550 = vmatpush.msra.mxu0 0.0
        %551 = vmatpush.msra.mxu0 0.0
        %v552 = vand.u32 %v409, 4294901760
        %553 = vmatpush.msra.mxu0 %v552
        %v554 = vand.u32 %v406, 4294901760
        %555 = vmatmul.f32.gmra.mxu0 %v554
        %v556 = vpop.f32.mrf.mxu0
        %v557 = vadd.f32 %v535, %v556
        %558 = vdwg.mxu0
        %559 = vmatpush.msra.mxu0 0.0
        %560 = vmatpush.msra.mxu0 0.0
        %561 = vmatpush.msra.mxu0 0.0
        %562 = vmatpush.msra.mxu0 0.0
        %563 = vmatpush.msra.mxu0 0.0
        %564 = vmatpush.msra.mxu0 0.0
        %565 = vmatpush.msra.mxu0 0.0
        %566 = vmatpush.msra.mxu0 0.0
        %567 = vmatpush.msra.mxu0 0.0
        %568 = vmatpush.msra.mxu0 0.0
        %569 = vmatpush.msra.mxu0 0.0
        %570 = vmatpush.msra.mxu0 0.0
        %571 = vmatpush.msra.mxu0 0.0
        %572 = vmatpush.msra.mxu0 0.0
        %573 = vmatpush.msra.mxu0 0.0
        %v574 = vand.u32 %v411, 4294901760
        %575 = vmatpush.msra.mxu0 %v574
        %v576 = vand.u32 %v406, 4294901760
        %v577 = vsub.f32 %v406, %v576
        %v578 = vand.u32 %v577, 4294901760
        %v579 = vsub.f32 %v577, %v578
        %v580 = vand.u32 %v579, 4294901760
        %581 = vmatmul.f32.gmra.mxu0 %v580
        %v582 = vpop.f32.mrf.mxu0
        %v583 = vadd.f32 0.0, %v582
        %584 = vdwg.mxu0
        %585 = vmatpush.msra.mxu0 0.0
        %586 = vmatpush.msra.mxu0 0.0
        %587 = vmatpush.msra.mxu0 0.0
        %588 = vmatpush.msra.mxu0 0.0
        %589 = vmatpush.msra.mxu0 0.0
        %590 = vmatpush.msra.mxu0 0.0
        %591 = vmatpush.msra.mxu0 0.0
        %592 = vmatpush.msra.mxu0 0.0
        %593 = vmatpush.msra.mxu0 0.0
        %594 = vmatpush.msra.mxu0 0.0
        %595 = vmatpush.msra.mxu0 0.0
        %596 = vmatpush.msra.mxu0 0.0
        %597 = vmatpush.msra.mxu0 0.0
        %598 = vmatpush.msra.mxu0 0.0
        %599 = vmatpush.msra.mxu0 0.0
        %v600 = vand.u32 %v411, 4294901760
        %v601 = vsub.f32 %v411, %v600
        %v602 = vand.u32 %v601, 4294901760
        %v603 = vsub.f32 %v601, %v602
        %v604 = vand.u32 %v603, 4294901760
        %605 = vmatpush.msra.mxu0 %v604
        %v606 = vand.u32 %v406, 4294901760
        %607 = vmatmul.f32.gmra.mxu0 %v606
        %v608 = vpop.f32.mrf.mxu0
        %v609 = vadd.f32 %v583, %v608
        %610 = vdwg.mxu0
        %611 = vmatpush.msra.mxu0 0.0
        %612 = vmatpush.msra.mxu0 0.0
        %613 = vmatpush.msra.mxu0 0.0
        %614 = vmatpush.msra.mxu0 0.0
        %615 = vmatpush.msra.mxu0 0.0
        %616 = vmatpush.msra.mxu0 0.0
        %617 = vmatpush.msra.mxu0 0.0
        %618 = vmatpush.msra.mxu0 0.0
        %619 = vmatpush.msra.mxu0 0.0
        %620 = vmatpush.msra.mxu0 0.0
        %621 = vmatpush.msra.mxu0 0.0
        %622 = vmatpush.msra.mxu0 0.0
        %623 = vmatpush.msra.mxu0 0.0
        %624 = vmatpush.msra.mxu0 0.0
        %625 = vmatpush.msra.mxu0 0.0
        %v626 = vand.u32 %v411, 4294901760
        %v627 = vsub.f32 %v411, %v626
        %628 = vmatpush.msra.mxu0 %v627
        %v629 = vand.u32 %v406, 4294901760
        %v630 = vsub.f32 %v406, %v629
        %631 = vmatmul.f32.gmra.mxu0 %v630
        %v632 = vpop.f32.mrf.mxu0
        %v633 = vadd.f32 %v609, %v632
        %634 = vdwg.mxu0
        %635 = vmatpush.msra.mxu0 0.0
        %636 = vmatpush.msra.mxu0 0.0
        %637 = vmatpush.msra.mxu0 0.0
        %638 = vmatpush.msra.mxu0 0.0
        %639 = vmatpush.msra.mxu0 0.0
        %640 = vmatpush.msra.mxu0 0.0
        %641 = vmatpush.msra.mxu0 0.0
        %642 = vmatpush.msra.mxu0 0.0
        %643 = vmatpush.msra.mxu0 0.0
        %644 = vmatpush.msra.mxu0 0.0
        %645 = vmatpush.msra.mxu0 0.0
        %646 = vmatpush.msra.mxu0 0.0
        %647 = vmatpush.msra.mxu0 0.0
        %648 = vmatpush.msra.mxu0 0.0
        %649 = vmatpush.msra.mxu0 0.0
        %v650 = vand.u32 %v411, 4294901760
        %651 = vmatpush.msra.mxu0 %v650
        %v652 = vand.u32 %v406, 4294901760
        %v653 = vsub.f32 %v406, %v652
        %v654 = vand.u32 %v653, 4294901760
        %655 = vmatmul.f32.gmra.mxu0 %v654
        %v656 = vpop.f32.mrf.mxu0
        %v657 = vadd.f32 %v633, %v656
        %658 = vdwg.mxu0
        %659 = vmatpush.msra.mxu0 0.0
        %660 = vmatpush.msra.mxu0 0.0
        %661 = vmatpush.msra.mxu0 0.0
        %662 = vmatpush.msra.mxu0 0.0
        %663 = vmatpush.msra.mxu0 0.0
        %664 = vmatpush.msra.mxu0 0.0
        %665 = vmatpush.msra.mxu0 0.0
        %666 = vmatpush.msra.mxu0 0.0
        %667 = vmatpush.msra.mxu0 0.0
        %668 = vmatpush.msra.mxu0 0.0
        %669 = vmatpush.msra.mxu0 0.0
        %670 = vmatpush.msra.mxu0 0.0
        %671 = vmatpush.msra.mxu0 0.0
        %672 = vmatpush.msra.mxu0 0.0
        %673 = vmatpush.msra.mxu0 0.0
        %v674 = vand.u32 %v411, 4294901760
        %v675 = vsub.f32 %v411, %v674
        %v676 = vand.u32 %v675, 4294901760
        %677 = vmatpush.msra.mxu0 %v676
        %v678 = vand.u32 %v406, 4294901760
        %679 = vmatmul.f32.gmra.mxu0 %v678
        %v680 = vpop.f32.mrf.mxu0
        %v681 = vadd.f32 %v657, %v680
        %682 = vdwg.mxu0
        %683 = vmatpush.msra.mxu0 0.0
        %684 = vmatpush.msra.mxu0 0.0
        %685 = vmatpush.msra.mxu0 0.0
        %686 = vmatpush.msra.mxu0 0.0
        %687 = vmatpush.msra.mxu0 0.0
        %688 = vmatpush.msra.mxu0 0.0
        %689 = vmatpush.msra.mxu0 0.0
        %690 = vmatpush.msra.mxu0 0.0
        %691 = vmatpush.msra.mxu0 0.0
        %692 = vmatpush.msra.mxu0 0.0
        %693 = vmatpush.msra.mxu0 0.0
        %694 = vmatpush.msra.mxu0 0.0
        %695 = vmatpush.msra.mxu0 0.0
        %696 = vmatpush.msra.mxu0 0.0
        %697 = vmatpush.msra.mxu0 0.0
        %v698 = vand.u32 %v411, 4294901760
        %699 = vmatpush.msra.mxu0 %v698
        %v700 = vand.u32 %v406, 4294901760
        %701 = vmatmul.f32.gmra.mxu0 %v700
        %v702 = vpop.f32.mrf.mxu0
        %v703 = vadd.f32 %v681, %v702
        %704 = vdwg.mxu0
        %706 = vst [vmem:[#allocation1] ss:$2 sm:$0xff] %v395
        %v707 = vld.sshfl [vmem:[#allocation1] sm:$0xff pattern:$0x75316420]
        %v708 = vld.sshfl [vmem:[#allocation1 + $0x8] sm:$0xff pattern:$0x75316420]
        %v710 = vsel %vm404, %v398, 0
        %v712 = vsel %vm408, %v707, 0
        %v714 = vsel %vm408, %v708, 0
        %716 = vmatpush.msra.mxu0 0.0
        %717 = vmatpush.msra.mxu0 0.0
        %718 = vmatpush.msra.mxu0 0.0
        %719 = vmatpush.msra.mxu0 0.0
        %720 = vmatpush.msra.mxu0 0.0
        %721 = vmatpush.msra.mxu0 0.0
        %722 = vmatpush.msra.mxu0 0.0
        %723 = vmatpush.msra.mxu0 0.0
        %724 = vmatpush.msra.mxu0 0.0
        %725 = vmatpush.msra.mxu0 0.0
        %726 = vmatpush.msra.mxu0 0.0
        %727 = vmatpush.msra.mxu0 0.0
        %728 = vmatpush.msra.mxu0 0.0
        %729 = vmatpush.msra.mxu0 0.0
        %730 = vmatpush.msra.mxu0 0.0
        %v731 = vand.u32 %v712, 4294901760
        %732 = vmatpush.msra.mxu0 %v731
        %v733 = vand.u32 %v710, 4294901760
        %v734 = vsub.f32 %v710, %v733
        %v735 = vand.u32 %v734, 4294901760
        %v736 = vsub.f32 %v734, %v735
        %v737 = vand.u32 %v736, 4294901760
        %738 = vmatmul.f32.gmra.mxu0 %v737
        %v739 = vpop.f32.mrf.mxu0
        %v740 = vadd.f32 %v557, %v739
        %741 = vdwg.mxu0
        %742 = vmatpush.msra.mxu0 0.0
        %743 = vmatpush.msra.mxu0 0.0
        %744 = vmatpush.msra.mxu0 0.0
        %745 = vmatpush.msra.mxu0 0.0
        %746 = vmatpush.msra.mxu0 0.0
        %747 = vmatpush.msra.mxu0 0.0
        %748 = vmatpush.msra.mxu0 0.0
        %749 = vmatpush.msra.mxu0 0.0
        %750 = vmatpush.msra.mxu0 0.0
        %751 = vmatpush.msra.mxu0 0.0
        %752 = vmatpush.msra.mxu0 0.0
        %753 = vmatpush.msra.mxu0 0.0
        %754 = vmatpush.msra.mxu0 0.0
        %755 = vmatpush.msra.mxu0 0.0
        %756 = vmatpush.msra.mxu0 0.0
        %v757 = vand.u32 %v712, 4294901760
        %v758 = vsub.f32 %v712, %v757
        %v759 = vand.u32 %v758, 4294901760
        %v760 = vsub.f32 %v758, %v759
        %v761 = vand.u32 %v760, 4294901760
        %762 = vmatpush.msra.mxu0 %v761
        %v763 = vand.u32 %v710, 4294901760
        %764 = vmatmul.f32.gmra.mxu0 %v763
        %v765 = vpop.f32.mrf.mxu0
        %v766 = vadd.f32 %v740, %v765
        %767 = vdwg.mxu0
        %768 = vmatpush.msra.mxu0 0.0
        %769 = vmatpush.msra.mxu0 0.0
        %770 = vmatpush.msra.mxu0 0.0
        %771 = vmatpush.msra.mxu0 0.0
        %772 = vmatpush.msra.mxu0 0.0
        %773 = vmatpush.msra.mxu0 0.0
        %774 = vmatpush.msra.mxu0 0.0
        %775 = vmatpush.msra.mxu0 0.0
        %776 = vmatpush.msra.mxu0 0.0
        %777 = vmatpush.msra.mxu0 0.0
        %778 = vmatpush.msra.mxu0 0.0
        %779 = vmatpush.msra.mxu0 0.0
        %780 = vmatpush.msra.mxu0 0.0
        %781 = vmatpush.msra.mxu0 0.0
        %782 = vmatpush.msra.mxu0 0.0
        %v783 = vand.u32 %v712, 4294901760
        %v784 = vsub.f32 %v712, %v783
        %785 = vmatpush.msra.mxu0 %v784
        %v786 = vand.u32 %v710, 4294901760
        %v787 = vsub.f32 %v710, %v786
        %788 = vmatmul.f32.gmra.mxu0 %v787
        %v789 = vpop.f32.mrf.mxu0
        %v790 = vadd.f32 %v766, %v789
        %791 = vdwg.mxu0
        %792 = vmatpush.msra.mxu0 0.0
        %793 = vmatpush.msra.mxu0 0.0
        %794 = vmatpush.msra.mxu0 0.0
        %795 = vmatpush.msra.mxu0 0.0
        %796 = vmatpush.msra.mxu0 0.0
        %797 = vmatpush.msra.mxu0 0.0
        %798 = vmatpush.msra.mxu0 0.0
        %799 = vmatpush.msra.mxu0 0.0
        %800 = vmatpush.msra.mxu0 0.0
        %801 = vmatpush.msra.mxu0 0.0
        %802 = vmatpush.msra.mxu0 0.0
        %803 = vmatpush.msra.mxu0 0.0
        %804 = vmatpush.msra.mxu0 0.0
        %805 = vmatpush.msra.mxu0 0.0
        %806 = vmatpush.msra.mxu0 0.0
        %v807 = vand.u32 %v712, 4294901760
        %808 = vmatpush.msra.mxu0 %v807
        %v809 = vand.u32 %v710, 4294901760
        %v810 = vsub.f32 %v710, %v809
        %v811 = vand.u32 %v810, 4294901760
        %812 = vmatmul.f32.gmra.mxu0 %v811
        %v813 = vpop.f32.mrf.mxu0
        %v814 = vadd.f32 %v790, %v813
        %815 = vdwg.mxu0
        %816 = vmatpush.msra.mxu0 0.0
        %817 = vmatpush.msra.mxu0 0.0
        %818 = vmatpush.msra.mxu0 0.0
        %819 = vmatpush.msra.mxu0 0.0
        %820 = vmatpush.msra.mxu0 0.0
        %821 = vmatpush.msra.mxu0 0.0
        %822 = vmatpush.msra.mxu0 0.0
        %823 = vmatpush.msra.mxu0 0.0
        %824 = vmatpush.msra.mxu0 0.0
        %825 = vmatpush.msra.mxu0 0.0
        %826 = vmatpush.msra.mxu0 0.0
        %827 = vmatpush.msra.mxu0 0.0
        %828 = vmatpush.msra.mxu0 0.0
        %829 = vmatpush.msra.mxu0 0.0
        %830 = vmatpush.msra.mxu0 0.0
        %v831 = vand.u32 %v712, 4294901760
        %v832 = vsub.f32 %v712, %v831
        %v833 = vand.u32 %v832, 4294901760
        %834 = vmatpush.msra.mxu0 %v833
        %v835 = vand.u32 %v710, 4294901760
        %836 = vmatmul.f32.gmra.mxu0 %v835
        %v837 = vpop.f32.mrf.mxu0
        %v838 = vadd.f32 %v814, %v837
        %839 = vdwg.mxu0
        %840 = vmatpush.msra.mxu0 0.0
        %841 = vmatpush.msra.mxu0 0.0
        %842 = vmatpush.msra.mxu0 0.0
        %843 = vmatpush.msra.mxu0 0.0
        %844 = vmatpush.msra.mxu0 0.0
        %845 = vmatpush.msra.mxu0 0.0
        %846 = vmatpush.msra.mxu0 0.0
        %847 = vmatpush.msra.mxu0 0.0
        %848 = vmatpush.msra.mxu0 0.0
        %849 = vmatpush.msra.mxu0 0.0
        %850 = vmatpush.msra.mxu0 0.0
        %851 = vmatpush.msra.mxu0 0.0
        %852 = vmatpush.msra.mxu0 0.0
        %853 = vmatpush.msra.mxu0 0.0
        %854 = vmatpush.msra.mxu0 0.0
        %v855 = vand.u32 %v712, 4294901760
        %856 = vmatpush.msra.mxu0 %v855
        %v857 = vand.u32 %v710, 4294901760
        %858 = vmatmul.f32.gmra.mxu0 %v857
        %v859 = vpop.f32.mrf.mxu0
        %v860 = vadd.f32 %v838, %v859
        %861 = vdwg.mxu0
        %862 = vmatpush.msra.mxu0 0.0
        %863 = vmatpush.msra.mxu0 0.0
        %864 = vmatpush.msra.mxu0 0.0
        %865 = vmatpush.msra.mxu0 0.0
        %866 = vmatpush.msra.mxu0 0.0
        %867 = vmatpush.msra.mxu0 0.0
        %868 = vmatpush.msra.mxu0 0.0
        %869 = vmatpush.msra.mxu0 0.0
        %870 = vmatpush.msra.mxu0 0.0
        %871 = vmatpush.msra.mxu0 0.0
        %872 = vmatpush.msra.mxu0 0.0
        %873 = vmatpush.msra.mxu0 0.0
        %874 = vmatpush.msra.mxu0 0.0
        %875 = vmatpush.msra.mxu0 0.0
        %876 = vmatpush.msra.mxu0 0.0
        %v877 = vand.u32 %v714, 4294901760
        %878 = vmatpush.msra.mxu0 %v877
        %v879 = vand.u32 %v710, 4294901760
        %v880 = vsub.f32 %v710, %v879
        %v881 = vand.u32 %v880, 4294901760
        %v882 = vsub.f32 %v880, %v881
        %v883 = vand.u32 %v882, 4294901760
        %884 = vmatmul.f32.gmra.mxu0 %v883
        %v885 = vpop.f32.mrf.mxu0
        %v886 = vadd.f32 %v703, %v885
        %887 = vdwg.mxu0
        %888 = vmatpush.msra.mxu0 0.0
        %889 = vmatpush.msra.mxu0 0.0
        %890 = vmatpush.msra.mxu0 0.0
        %891 = vmatpush.msra.mxu0 0.0
        %892 = vmatpush.msra.mxu0 0.0
        %893 = vmatpush.msra.mxu0 0.0
        %894 = vmatpush.msra.mxu0 0.0
        %895 = vmatpush.msra.mxu0 0.0
        %896 = vmatpush.msra.mxu0 0.0
        %897 = vmatpush.msra.mxu0 0.0
        %898 = vmatpush.msra.mxu0 0.0
        %899 = vmatpush.msra.mxu0 0.0
        %900 = vmatpush.msra.mxu0 0.0
        %901 = vmatpush.msra.mxu0 0.0
        %902 = vmatpush.msra.mxu0 0.0
        %v903 = vand.u32 %v714, 4294901760
        %v904 = vsub.f32 %v714, %v903
        %v905 = vand.u32 %v904, 4294901760
        %v906 = vsub.f32 %v904, %v905
        %v907 = vand.u32 %v906, 4294901760
        %908 = vmatpush.msra.mxu0 %v907
        %v909 = vand.u32 %v710, 4294901760
        %910 = vmatmul.f32.gmra.mxu0 %v909
        %v911 = vpop.f32.mrf.mxu0
        %v912 = vadd.f32 %v886, %v911
        %913 = vdwg.mxu0
        %914 = vmatpush.msra.mxu0 0.0
        %915 = vmatpush.msra.mxu0 0.0
        %916 = vmatpush.msra.mxu0 0.0
        %917 = vmatpush.msra.mxu0 0.0
        %918 = vmatpush.msra.mxu0 0.0
        %919 = vmatpush.msra.mxu0 0.0
        %920 = vmatpush.msra.mxu0 0.0
        %921 = vmatpush.msra.mxu0 0.0
        %922 = vmatpush.msra.mxu0 0.0
        %923 = vmatpush.msra.mxu0 0.0
        %924 = vmatpush.msra.mxu0 0.0
        %925 = vmatpush.msra.mxu0 0.0
        %926 = vmatpush.msra.mxu0 0.0
        %927 = vmatpush.msra.mxu0 0.0
        %928 = vmatpush.msra.mxu0 0.0
        %v929 = vand.u32 %v714, 4294901760
        %v930 = vsub.f32 %v714, %v929
        %931 = vmatpush.msra.mxu0 %v930
        %v932 = vand.u32 %v710, 4294901760
        %v933 = vsub.f32 %v710, %v932
        %934 = vmatmul.f32.gmra.mxu0 %v933
        %v935 = vpop.f32.mrf.mxu0
        %v936 = vadd.f32 %v912, %v935
        %937 = vdwg.mxu0
        %938 = vmatpush.msra.mxu0 0.0
        %939 = vmatpush.msra.mxu0 0.0
        %940 = vmatpush.msra.mxu0 0.0
        %941 = vmatpush.msra.mxu0 0.0
        %942 = vmatpush.msra.mxu0 0.0
        %943 = vmatpush.msra.mxu0 0.0
        %944 = vmatpush.msra.mxu0 0.0
        %945 = vmatpush.msra.mxu0 0.0
        %946 = vmatpush.msra.mxu0 0.0
        %947 = vmatpush.msra.mxu0 0.0
        %948 = vmatpush.msra.mxu0 0.0
        %949 = vmatpush.msra.mxu0 0.0
        %950 = vmatpush.msra.mxu0 0.0
        %951 = vmatpush.msra.mxu0 0.0
        %952 = vmatpush.msra.mxu0 0.0
        %v953 = vand.u32 %v714, 4294901760
        %954 = vmatpush.msra.mxu0 %v953
        %v955 = vand.u32 %v710, 4294901760
        %v956 = vsub.f32 %v710, %v955
        %v957 = vand.u32 %v956, 4294901760
        %958 = vmatmul.f32.gmra.mxu0 %v957
        %v959 = vpop.f32.mrf.mxu0
        %v960 = vadd.f32 %v936, %v959
        %961 = vdwg.mxu0
        %962 = vmatpush.msra.mxu0 0.0
        %963 = vmatpush.msra.mxu0 0.0
        %964 = vmatpush.msra.mxu0 0.0
        %965 = vmatpush.msra.mxu0 0.0
        %966 = vmatpush.msra.mxu0 0.0
        %967 = vmatpush.msra.mxu0 0.0
        %968 = vmatpush.msra.mxu0 0.0
        %969 = vmatpush.msra.mxu0 0.0
        %970 = vmatpush.msra.mxu0 0.0
        %971 = vmatpush.msra.mxu0 0.0
        %972 = vmatpush.msra.mxu0 0.0
        %973 = vmatpush.msra.mxu0 0.0
        %974 = vmatpush.msra.mxu0 0.0
        %975 = vmatpush.msra.mxu0 0.0
        %976 = vmatpush.msra.mxu0 0.0
        %v977 = vand.u32 %v714, 4294901760
        %v978 = vsub.f32 %v714, %v977
        %v979 = vand.u32 %v978, 4294901760
        %980 = vmatpush.msra.mxu0 %v979
        %v981 = vand.u32 %v710, 4294901760
        %982 = vmatmul.f32.gmra.mxu0 %v981
        %v983 = vpop.f32.mrf.mxu0
        %v984 = vadd.f32 %v960, %v983
        %985 = vdwg.mxu0
        %986 = vmatpush.msra.mxu0 0.0
        %987 = vmatpush.msra.mxu0 0.0
        %988 = vmatpush.msra.mxu0 0.0
        %989 = vmatpush.msra.mxu0 0.0
        %990 = vmatpush.msra.mxu0 0.0
        %991 = vmatpush.msra.mxu0 0.0
        %992 = vmatpush.msra.mxu0 0.0
        %993 = vmatpush.msra.mxu0 0.0
        %994 = vmatpush.msra.mxu0 0.0
        %995 = vmatpush.msra.mxu0 0.0
        %996 = vmatpush.msra.mxu0 0.0
        %997 = vmatpush.msra.mxu0 0.0
        %998 = vmatpush.msra.mxu0 0.0
        %999 = vmatpush.msra.mxu0 0.0
        %1000 = vmatpush.msra.mxu0 0.0
        %v1001 = vand.u32 %v714, 4294901760
        %1002 = vmatpush.msra.mxu0 %v1001
        %v1003 = vand.u32 %v710, 4294901760
        %1004 = vmatmul.f32.gmra.mxu0 %v1003
        %v1005 = vpop.f32.mrf.mxu0
        %v1006 = vadd.f32 %v984, %v1005
        %1007 = vdwg.mxu0
        %v1008 = vld [vmem:[%s5] sm:$0xff]
        %1010 = vset.pattern.permute.xlu0 0
        %1011 = vperm.xlu0 %1010, %v1008
        %v1012 = vpop.permute.xlu0 %1011
        %v1014 = vadd.f32 %v860, %v1012
        %v1015 = vadd.f32 %v1006, %v1012
        %1016 = vst [vmem:[%s357] sm:$0xff] %v1014
        %1017 = vst [vmem:[%s357 + $0x8] sm:$0xff] %v1015
        %s1018 = sand.u32 %s195, 1
        %s1019 = scalar_lea.sflag [#allocation4], %s1018
        %s1020 = sand.u32 %s195, 1
        %s1021 = smul.addr %s1020, 16
        %s1022 = scalar_lea.vmem [#allocation7], %s1021
        // Predicated region
        $region53: #{tpu_custom_call.1} parent=43 // pred_check
          %p1023 = pneg %p205
        $region54: #{tpu_custom_call.1} parent=43 // pred_check_branch
          %1025 = sbr.rel (%p1023) target = $region56
        $region55: #{tpu_custom_call.1} parent=43 // pred_region
          %s1026 = smul.u32 2, %s31
          %1028 = vsyncadd %s1019, 0
          %s1029 = smul.addr %s30, 2
          %s1030 = sadd.s32 %s1026, %s1029
          %s1031 = smul.addr %s1030, 8
          %s1032 = scalar_lea.hbm %s6, %s1031
          %s1034 = sshll.u32 %s1022, 4
          %s1035 = int_to_ptr.vmem [resolvable:$true] %s1034
          %s1036 = sshll.u32 %s1032, 4
          %s1037 = int_to_ptr.hbm [resolvable:$true] %s1036
          %1039 = dma.vmem_to_hbm [thread:$0]  %s1035, 256, %s1037, %s1019
        $region56: #{tpu_custom_call.1} parent=43 // pred_fallthru
          _
      $region44: #{tpu_custom_call.1} parent=5 // pred_fallthru
        _
      %p1040 = scmp.le.s32.totalorder 2, %s21
      // Predicated region
      $region57: #{tpu_custom_call.1} parent=5 // pred_check
        %p1041 = pneg %p1040
      $region58: #{tpu_custom_call.1} parent=5 // pred_check_branch
        %1043 = sbr.rel (%p1041) target = $region60
      $region59: #{tpu_custom_call.1} parent=5 // pred_region
        %s1044 = ssub.s32 %s21, 2
        // Predicated region
        $region61: #{tpu_custom_call.1} parent=59 // pred_check
          %p1045 = pneg %p211
        $region62: #{tpu_custom_call.1} parent=59 // pred_check_branch
          %1047 = sbr.rel (%p1045) target = $region64
        $region63: #{tpu_custom_call.1} parent=59 // pred_region
          %s1048 = sand.u32 %s196, 1
          %s1049 = scalar_lea.sflag [#allocation4], %s1048
          %s1050 = sand.u32 %s196, 1
          %s1051 = smul.addr %s1050, 16
          %s1052 = scalar_lea.vmem [#allocation7], %s1051
          %1054 = dma.done %s1049, 256
        $region64: #{tpu_custom_call.1} parent=59 // pred_fallthru
          _
      $region60: #{tpu_custom_call.1} parent=5 // pred_fallthru
        _
    $region6: #{tpu_custom_call.1} parent=1 // loop_footer
      %s25 = sadd.s32 1, %s21
    $region7: #{tpu_custom_call.1} parent=1 // loop_footer_branch
      %20 = sbr.rel target = $region3
    $region8: #{tpu_custom_call.1} parent=1 // loop_exit
      _
    %1055 = vsyncpa [#allocation3], 1
    %s1056 = scalar_lea.sflag [#allocation3], 1
    %1057 = vsyncpa %s1056, 1
    %1058 = vsyncpa [#allocation6], 1
    %s1059 = scalar_lea.sflag [#allocation6], 1
    %1060 = vsyncpa %s1059, 1
    %1061 = vsyncpa [#allocation4], 1
    %s1062 = scalar_lea.sflag [#allocation4], 1
    %1063 = vsyncpa %s1062, 1

</llo_original>
